<compile_context>
chip_gen: v7x
topology: tpu7x:2x2x1
jax: 0.10.0
libtpu: 0.0.40
codegen_flags: <defaults>
</compile_context>

<pallas_src>
import jax
import jax.numpy as jnp
from jax.experimental import pallas as pl
from jax.experimental.pallas import tpu as pltpu


_TRANS_B = (((1,), (1,)), ((), ()))  # contract last dim of both operands


def _value_mlp_kernel(x_ref, w1_ref, b1_ref, w2_ref, b2_ref, o_ref):
    # x: (tb, D), w1: (D, H), b1: (1, H), w2: (1, H), b2: SMEM (1,), o: (1, tb)
    x = x_ref[...]
    # Layer 1 on the MXU (bf16 in / f32 accumulate); bias add on the VPU.
    h = jnp.dot(x, w1_ref[...], preferred_element_type=jnp.float32) + b1_ref[...]
    h = jnp.tanh(h)  # EUP transcendental, on the f32 accumulator
    # Layer 2: v[0, r] = sum_k w2[0, k] * h[r, k].  A (1,H) x (tb,H)^T
    # contraction produces a lane-dense (1, tb) row directly, so the store is
    # unmasked and the output VMEM buffer is only (8, tb) after lane padding.
    v = jax.lax.dot_general(
        w2_ref[...], h, _TRANS_B, preferred_element_type=jnp.float32)
    v = v + b2_ref[0]
    o_ref[...] = v.astype(o_ref.dtype)


def _round_up(a, m):
    return ((a + m - 1) // m) * m


def _derive_tile_and_vmem(D, H, x_itemsize, w_itemsize, budget_bytes):
    """Pick the batch tile from a lane-padded VMEM budget."""
    lane_d = max(_round_up(D, 128), 128)
    lane_h = max(_round_up(H, 128), 128)
    # Resident operands (conservatively assume default double-buffering).
    weights = 2 * _round_up(D, 8) * lane_h * w_itemsize          # W1
    weights += 2 * 2 * 8 * lane_h * 4                            # b1, w2 rows (f32)
    # Streamed bytes per batch row: double-buffered (tb, D) x tile plus the
    # double-buffered (1, tb) f32 out tile (pads to (8, tb) in VMEM).
    per_row = 2 * lane_d * x_itemsize + 2 * 8 * 4
    avail = max(budget_bytes - weights, 128 * per_row)
    tb = max(128, min(4096, (avail // per_row) // 128 * 128))
    return tb, weights, per_row


def safety_value_forward(x, w1, b1, w2, b2, *, tile_b=None, use_bf16=True,
                         vmem_budget_bytes=32 * 1024 * 1024):
    """Fused MLP value-function forward pass as a single Pallas kernel.

    x: (B, D); w1: (D, H); b1: (1, H); w2: (H, 1); b2: (1, 1).
    Returns (B, 1) float32.
    """
    B, D = x.shape
    H = w1.shape[1]
    assert w1.shape == (D, H) and b1.shape == (1, H)
    assert w2.shape == (H, 1) and b2.shape == (1, 1)

    x_in, w1_in = x, w1
    if use_bf16:
        # Halves the dominant x HBM read stream; f32 MXU accumulation keeps
        # accuracy.  (In a real pipeline the activations already arrive in
        # bf16 / the cast fuses with the producer; for a cold f32 input the
        # cast itself costs one extra copy.)
        if x_in.dtype != jnp.bfloat16:
            x_in = x_in.astype(jnp.bfloat16)
        if w1_in.dtype != jnp.bfloat16:
            w1_in = w1_in.astype(jnp.bfloat16)

    x_itemsize = jnp.dtype(x_in.dtype).itemsize
    w_itemsize = jnp.dtype(w1_in.dtype).itemsize

    auto_tb, weights_bytes, per_row = _derive_tile_and_vmem(
        D, H, x_itemsize, w_itemsize, vmem_budget_bytes)

    b_aligned = _round_up(B, 8)
    tb = auto_tb if tile_b is None else max(8, _round_up(tile_b, 8))
    if tb >= b_aligned:
        tb = b_aligned                      # one tile covers the whole batch
    else:
        tb = max(128, tb // 128 * 128)      # multi-tile: lane-dense out needs 128 | tb
        if tb >= b_aligned:
            tb = b_aligned

    n_tiles = pl.cdiv(B, tb)
    total = n_tiles * tb

    # Explicit scoped-VMEM limit sized to the actual (lane-padded) footprint:
    # v5e's 16 MiB scoped default would otherwise cap large tiles; capped at
    # 64 MiB so it is always legal on v7x's smaller physical VMEM.
    est_vmem = weights_bytes + per_row * tb
    vmem_limit = int(min(64 * 1024 * 1024,
                         max(32 * 1024 * 1024, est_vmem + 8 * 1024 * 1024)))

    b1_f32 = b1.astype(jnp.float32)
    w2_row = w2.reshape(1, H).astype(jnp.float32)   # lane-major weight row
    b2_s = b2.reshape(1).astype(jnp.float32)        # SMEM scalar

    out = pl.pallas_call(
        _value_mlp_kernel,
        out_shape=jax.ShapeDtypeStruct((1, total), jnp.float32),
        grid=(n_tiles,),
        in_specs=[
            # Streamed, double-buffered batch tiles of x.  Ragged tail is
            # handled by Pallas' partial-block clamp (no padded HBM copy).
            pl.BlockSpec((tb, D), lambda i: (i, 0)),
            # Resident weights / biases: constant index maps.
            pl.BlockSpec((D, H), lambda i: (0, 0)),
            pl.BlockSpec((1, H), lambda i: (0, 0)),
            pl.BlockSpec((1, H), lambda i: (0, 0)),
            # b2 as an SMEM scalar (no padded (8,128) VMEM tile / DMA).
            pl.BlockSpec(memory_space=pltpu.MemorySpace.SMEM),
        ],
        # Lane-dense (1, tb) output row per tile.
        out_specs=pl.BlockSpec((1, tb), lambda i: (0, i)),
        compiler_params=pltpu.CompilerParams(
            dimension_semantics=("parallel",),
            vmem_limit_bytes=vmem_limit,
        ),
    )(x_in, w1_in, b1_f32, w2_row, b2_s)

    return out.reshape(total, 1)[:B]


def _reference(x, w1, b1, w2, b2):
    h = jnp.tanh(x @ w1 + b1)
    return h @ w2 + b2


if __name__ == "__main__":
    key = jax.random.PRNGKey(0)
    k_x, k_w1, k_b1, k_w2, k_b2 = jax.random.split(key, 5)

    B, D, H = 8, 32, 32  # batch, state_dim, hidden
    x = jax.random.normal(k_x, (B, D), dtype=jnp.float32)
    w1 = jax.random.normal(k_w1, (D, H), dtype=jnp.float32) * (1.0 / jnp.sqrt(D))
    b1 = jax.random.normal(k_b1, (1, H), dtype=jnp.float32) * 0.01
    w2 = jax.random.normal(k_w2, (H, 1), dtype=jnp.float32) * (1.0 / jnp.sqrt(H))
    b2 = jax.random.normal(k_b2, (1, 1), dtype=jnp.float32) * 0.01

    ref = _reference(x, w1, b1, w2, b2)

    # Exact-f32 path (strict-tolerance test mode).
    out_f32 = jax.block_until_ready(
        safety_value_forward(x, w1, b1, w2, b2, use_bf16=False))
    assert out_f32.shape == (B, 1)
    assert jnp.allclose(out_f32, ref, atol=1e-5, rtol=1e-5), "f32 path mismatch"

    # Default bf16-streaming path (perf mode): looser tolerance by design.
    out_bf16 = jax.block_until_ready(safety_value_forward(x, w1, b1, w2, b2))
    assert out_bf16.shape == (B, 1)
    assert jnp.allclose(out_bf16, ref, atol=5e-2, rtol=5e-2), "bf16 path mismatch"

    # Ragged, multi-tile batch: exercises the no-pad partial-tail path.
    B2 = 300
    x2 = jax.random.normal(k_x, (B2, D), dtype=jnp.float32)
    ref2 = _reference(x2, w1, b1, w2, b2)
    out2 = jax.block_until_ready(
        safety_value_forward(x2, w1, b1, w2, b2, tile_b=128))
    assert out2.shape == (B2, 1)
    assert jnp.allclose(out2, ref2, atol=5e-2, rtol=5e-2), "ragged bf16 mismatch"

    print("KERNEL_OK")
</pallas_src>

<mosaic_0001>
module attributes {stable_mosaic.version = 11 : i64} {
  func.func @_value_mlp_kernel(%arg0: i32, %arg1: memref<8x32xf32, #tpu.memory_space<vmem>>, %arg2: memref<32x32xf32, #tpu.memory_space<vmem>>, %arg3: memref<1x32xf32, #tpu.memory_space<vmem>>, %arg4: memref<1x32xf32, #tpu.memory_space<vmem>>, %arg5: memref<1xf32, #tpu.memory_space<smem>>, %arg6: memref<1x8xf32, #tpu.memory_space<vmem>>) attributes {dimension_semantics = [#tpu.dimension_semantics<parallel>], iteration_bounds = array<i64: 1>, scalar_prefetch = 0 : i64, scratch_operands = 0 : i64, tpu.core_type = #tpu.core_type<tc>, window_params = [{transform_indices = @transform_0, window_bounds = array<i64: 8, 32>}, {pipeline_mode = #tpu.pipeline_mode<synchronous>, transform_indices = @transform_1, window_bounds = array<i64: 32, 32>}, {pipeline_mode = #tpu.pipeline_mode<synchronous>, transform_indices = @transform_2, window_bounds = array<i64: 1, 32>}, {pipeline_mode = #tpu.pipeline_mode<synchronous>, transform_indices = @transform_3, window_bounds = array<i64: 1, 32>}, {transform_indices = @transform_4, window_bounds = array<i64: 1>}, {transform_indices = @transform_5, window_bounds = array<i64: 1, 8>}]} {
    %c0 = arith.constant 0 : index
    %c0_0 = arith.constant 0 : index
    %0 = vector.load %arg1[%c0, %c0_0] : memref<8x32xf32, #tpu.memory_space<vmem>>, vector<8x32xf32>
    %c0_1 = arith.constant 0 : index
    %c0_2 = arith.constant 0 : index
    %1 = vector.load %arg2[%c0_1, %c0_2] : memref<32x32xf32, #tpu.memory_space<vmem>>, vector<32x32xf32>
    %cst = arith.constant dense<0.000000e+00> : vector<8x32xf32>
    %2 = tpu.matmul %0, %1, %cst {dimension_numbers = #tpu.dot_dimension_numbers<[1], [0], [0], [1], [0, 0, 1, 1], [], []>} : vector<8x32xf32>, vector<32x32xf32>, vector<8x32xf32> -> vector<8x32xf32>
    %c0_3 = arith.constant 0 : index
    %c0_4 = arith.constant 0 : index
    %3 = vector.load %arg3[%c0_3, %c0_4] : memref<1x32xf32, #tpu.memory_space<vmem>>, vector<1x32xf32>
    %4 = vector.broadcast %3 : vector<1x32xf32> to vector<8x32xf32>
    %5 = arith.addf %2, %4 : vector<8x32xf32>
    %6 = math.tanh %5 : vector<8x32xf32>
    %c0_5 = arith.constant 0 : index
    %c0_6 = arith.constant 0 : index
    %7 = vector.load %arg4[%c0_5, %c0_6] : memref<1x32xf32, #tpu.memory_space<vmem>>, vector<1x32xf32>
    %cst_7 = arith.constant dense<0.000000e+00> : vector<1x8xf32>
    %8 = tpu.matmul %7, %6, %cst_7 {dimension_numbers = #tpu.dot_dimension_numbers<[1], [1], [0], [0], [0, 0, 1, 0], [], []>} : vector<1x32xf32>, vector<8x32xf32>, vector<1x8xf32> -> vector<1x8xf32>
    %c0_8 = arith.constant 0 : index
    %9 = memref.load %arg5[%c0_8] : memref<1xf32, #tpu.memory_space<smem>>
    %10 = vector.broadcast %9 : f32 to vector<1x8xf32>
    %11 = arith.addf %8, %10 : vector<1x8xf32>
    %c0_9 = arith.constant 0 : index
    %c0_10 = arith.constant 0 : index
    %12 = vector.load %arg6[%c0_9, %c0_10] : memref<1x8xf32, #tpu.memory_space<vmem>>, vector<1x8xf32>
    tpu.vector_store %arg6[%c0_9, %c0_10], %11 {strides = array<i32>} : memref<1x8xf32, #tpu.memory_space<vmem>>, vector<1x8xf32>,
    return
  }
  func.func @transform_0(%arg0: i32) -> (i32, i32) {
    %c0_i32 = arith.constant 0 : i32
    %c0_i32_0 = arith.constant 0 : i32
    return %arg0, %c0_i32 : i32, i32
  }
  func.func @transform_1(%arg0: i32) -> (i32, i32) {
    %c0_i32 = arith.constant 0 : i32
    %c0_i32_0 = arith.constant 0 : i32
    %c0_i32_1 = arith.constant 0 : i32
    return %c0_i32, %c0_i32_0 : i32, i32
  }
  func.func @transform_2(%arg0: i32) -> (i32, i32) {
    %c0_i32 = arith.constant 0 : i32
    %c0_i32_0 = arith.constant 0 : i32
    %c0_i32_1 = arith.constant 0 : i32
    return %c0_i32, %c0_i32_0 : i32, i32
  }
  func.func @transform_3(%arg0: i32) -> (i32, i32) {
    %c0_i32 = arith.constant 0 : i32
    %c0_i32_0 = arith.constant 0 : i32
    %c0_i32_1 = arith.constant 0 : i32
    return %c0_i32, %c0_i32_0 : i32, i32
  }
  func.func @transform_4(%arg0: i32) -> i32 {
    %c0_i32 = arith.constant 0 : i32
    %c0_i32_0 = arith.constant 0 : i32
    return %c0_i32 : i32
  }
  func.func @transform_5(%arg0: i32) -> (i32, i32) {
    %c0_i32 = arith.constant 0 : i32
    %c0_i32_0 = arith.constant 0 : i32
    return %c0_i32, %arg0 : i32, i32
  }
}

</mosaic_0001>

<llo_original>
// kernel: tpu_custom_call.1
$region0: #{tpu_custom_call.1}
  #allocation0 [shape = 'u32[]', space=smem, size = 0x4, offset = 0x4, fixed_abs, tag = 'smem constant byte address 0x4 - core index']
  #allocation1 [shape = 'u32[144,128]{1,0:T(1,128)}', space=vmem, size = 0x12000, scoped, tag = 'internal scratch']
  #allocation2 [shape = 'f32[1]{0:T(128)S(6)}', space=smem, size = 0x200, scoped, tag = 'scoped memory for tpu_custom_call.1']
  %s0 = inlined_call_operand.hbm [shape: f32[8,32], index: 0, kind: input, shape index: {}]
  %s1 = inlined_call_operand.hbm [shape: f32[32,32], index: 1, kind: input, shape index: {}]
  %s2 = inlined_call_operand.vmem [shape: f32[1,32], index: 2, kind: input, shape index: {}]
  %s3 = inlined_call_operand.vmem [shape: f32[1,32], index: 3, kind: input, shape index: {}]
  %s4 = inlined_call_operand.<no memory space> [shape: f32[1], index: 4, kind: input, shape index: {}]
  %s5 = inlined_call_operand.hbm [shape: f32[1,8], index: 5, kind: output, shape index: {}]
  %s6 = sld [smem:[#allocation0]]
  $region38: #{tpu_custom_call.1} parent=0
    _
  %s8 = ssub.s32 1, %s6
  %s9 = scalar_select 0, %s8, %s6
  %10 = sst [smem:[#allocation2]] %s4
  $region1: #{tpu_custom_call.1} parent=0
    #allocation3 [shape = 'u8[4096]{0}', space=vmem, size = 0x1000, scoped, tag = 'input window, operand 0, single buffered']
    #allocation4 [shape = 's32[1]{0}', space=sflag, size = 0x4, scoped, tag = 'scoped memory for tpu_custom_call.1']
    #allocation5 [shape = 's32[1]{0}', space=sflag, size = 0x4, scoped, tag = 'scoped memory for tpu_custom_call.1']
    #allocation6 [shape = 'u8[16384]{0}', space=vmem, size = 0x4000, scoped, tag = 'input window, operand 1, single buffered']
    #allocation7 [shape = 's32[1]{0}', space=sflag, size = 0x4, scoped, tag = 'scoped memory for tpu_custom_call.1']
    #allocation8 [shape = 'u8[512]{0}', space=vmem, size = 0x400, scoped, tag = 'output window, operand 0, single buffered']
    %11 = vsyncpa [#allocation4], 0
    %12 = vsyncpa [#allocation7], 0
    %13 = vsyncpa [#allocation5], 0
    // Predicated region
    $region2: #{tpu_custom_call.1} parent=1 // pred_check
      _
    $region3: #{tpu_custom_call.1} parent=1 // pred_check_branch
      %15 = sbr.rel (0) target = $region5
    $region4: #{tpu_custom_call.1} parent=1 // pred_region
      %s17 = ssub.s32 128, 128
      %18 = vsyncadd [#allocation4], %s17
      %s20 = sshll.u32 [#allocation3], 4
      %s21 = int_to_ptr.vmem [resolvable:$true] %s20
      %23 = dma.hbm_to_vmem [thread:$0]  %s0, 128, %s21, [#allocation4]
    $region5: #{tpu_custom_call.1} parent=1 // pred_fallthru
      _
    // Predicated region
    $region6: #{tpu_custom_call.1} parent=1 // pred_check
      _
    $region7: #{tpu_custom_call.1} parent=1 // pred_check_branch
      %25 = sbr.rel (0) target = $region9
    $region8: #{tpu_custom_call.1} parent=1 // pred_region
      %s27 = ssub.s32 512, 512
      %28 = vsyncadd [#allocation7], %s27
      %s29 = sshll.u32 [#allocation6], 4
      %s30 = int_to_ptr.vmem [resolvable:$true] %s29
      %35 = dma.hbm_to_vmem [thread:$0]  %s1, 512, %s30, [#allocation7], 128, 128, 8
    $region9: #{tpu_custom_call.1} parent=1 // pred_fallthru
      _
    // Predicated region
    $region10: #{tpu_custom_call.1} parent=1 // pred_check
      _
    $region11: #{tpu_custom_call.1} parent=1 // pred_check_branch
      %37 = sbr.rel (0) target = $region13
    $region12: #{tpu_custom_call.1} parent=1 // pred_region
      _
    $region13: #{tpu_custom_call.1} parent=1 // pred_fallthru
      _
    // Predicated region
    $region14: #{tpu_custom_call.1} parent=1 // pred_check
      _
    $region15: #{tpu_custom_call.1} parent=1 // pred_check_branch
      %39 = sbr.rel (0) target = $region17
    $region16: #{tpu_custom_call.1} parent=1 // pred_region
      _
    $region17: #{tpu_custom_call.1} parent=1 // pred_fallthru
      _
    // Predicated region
    $region18: #{tpu_custom_call.1} parent=1 // pred_check
      _
    $region19: #{tpu_custom_call.1} parent=1 // pred_check_branch
      %41 = sbr.rel (0) target = $region21
    $region20: #{tpu_custom_call.1} parent=1 // pred_region
      _
    $region21: #{tpu_custom_call.1} parent=1 // pred_fallthru
      _
    // Predicated region
    $region22: #{tpu_custom_call.1} parent=1 // pred_check
      _
    $region23: #{tpu_custom_call.1} parent=1 // pred_check_branch
      %43 = sbr.rel (0) target = $region25
    $region24: #{tpu_custom_call.1} parent=1 // pred_region
      %44 = dma.done [#allocation4], 128
    $region25: #{tpu_custom_call.1} parent=1 // pred_fallthru
      _
    // Predicated region
    $region26: #{tpu_custom_call.1} parent=1 // pred_check
      _
    $region27: #{tpu_custom_call.1} parent=1 // pred_check_branch
      %46 = sbr.rel (0) target = $region29
    $region28: #{tpu_custom_call.1} parent=1 // pred_region
      %47 = dma.done [#allocation7], 512
    $region29: #{tpu_custom_call.1} parent=1 // pred_fallthru
      _
    %v48 = vld [vmem:[#allocation3] sm:$0xff]
    %v49 = vld [vmem:[#allocation6] sm:$0xff]
    %v50 = vld [vmem:[#allocation6 + $0x8] sm:$0xff]
    %v51 = vld [vmem:[#allocation6 + $0x10] sm:$0xff]
    %v52 = vld [vmem:[#allocation6 + $0x18] sm:$0xff]
    %v53 = vld [vmem:[%s2] sm:$0x1]
    %v55 = vlaneseq
    %v56 = vshrl.u32 %v55, 7
    %v57 = vsub.s32 0, %v56
    %v58 = vrot.slane %v53, %v57
    %vm60 = vcmask 261120
    %v62 = vsel %vm60, %v48, 0
    %64 = vmatprep.subr.mxu0 0.0
    %65 = vmatpush1.msra.mxu0 %v49
    %66 = vmatprep.subr.mxu0 0.0
    %67 = vmatpush1.msra.mxu0 %v50
    %68 = vmatprep.subr.mxu0 0.0
    %69 = vmatpush1.msra.mxu0 %v51
    %70 = vmatprep.subr.mxu0 0.0
    %71 = vmatpush1.msra.mxu0 %v52
    %72 = vmatprep.subr.mxu0 0.0
    %73 = vmatpush1.msra.mxu0 0.0
    %74 = vmatprep.subr.mxu0 0.0
    %75 = vmatpush1.msra.mxu0 0.0
    %76 = vmatprep.subr.mxu0 0.0
    %77 = vmatpush1.msra.mxu0 0.0
    %78 = vmatprep.subr.mxu0 0.0
    %79 = vmatpush1.msra.mxu0 0.0
    %80 = vmatprep.subr.mxu0 0.0
    %81 = vmatpush1.msra.mxu0 0.0
    %82 = vmatprep.subr.mxu0 0.0
    %83 = vmatpush1.msra.mxu0 0.0
    %84 = vmatprep.subr.mxu0 0.0
    %85 = vmatpush1.msra.mxu0 0.0
    %86 = vmatprep.subr.mxu0 0.0
    %87 = vmatpush1.msra.mxu0 0.0
    %88 = vmatprep.subr.mxu0 0.0
    %89 = vmatpush1.msra.mxu0 0.0
    %90 = vmatprep.subr.mxu0 0.0
    %91 = vmatpush1.msra.mxu0 0.0
    %92 = vmatprep.subr.mxu0 0.0
    %93 = vmatpush1.msra.mxu0 0.0
    %94 = vmatprep.subr.mxu0 0.0
    %95 = vmatpush1.msra.mxu0 0.0
    %96 = vmatprep.subr.mxu0 0.0
    %97 = vmatpush1.msra.mxu0 0.0
    %98 = vmatprep.subr.mxu0 0.0
    %99 = vmatpush1.msra.mxu0 0.0
    %100 = vmatprep.subr.mxu0 0.0
    %101 = vmatpush1.msra.mxu0 0.0
    %102 = vmatprep.subr.mxu0 0.0
    %103 = vmatpush1.msra.mxu0 0.0
    %104 = vmatprep.subr.mxu0 0.0
    %105 = vmatpush1.msra.mxu0 0.0
    %106 = vmatprep.subr.mxu0 0.0
    %107 = vmatpush1.msra.mxu0 0.0
    %108 = vmatprep.subr.mxu0 0.0
    %109 = vmatpush1.msra.mxu0 0.0
    %110 = vmatprep.subr.mxu0 0.0
    %111 = vmatpush1.msra.mxu0 0.0
    %112 = vmatprep.subr.mxu0 0.0
    %113 = vmatpush1.msra.mxu0 0.0
    %114 = vmatprep.subr.mxu0 0.0
    %115 = vmatpush1.msra.mxu0 0.0
    %116 = vmatprep.subr.mxu0 0.0
    %117 = vmatpush1.msra.mxu0 0.0
    %118 = vmatprep.subr.mxu0 0.0
    %119 = vmatpush1.msra.mxu0 0.0
    %120 = vmatprep.subr.mxu0 0.0
    %121 = vmatpush1.msra.mxu0 0.0
    %122 = vmatprep.subr.mxu0 0.0
    %123 = vmatpush1.msra.mxu0 0.0
    %124 = vmatprep.subr.mxu0 0.0
    %125 = vmatpush1.msra.mxu0 0.0
    %126 = vmatprep.subr.mxu0 0.0
    %127 = vmatpush1.msra.mxu0 0.0
    %128 = vmatprep.mubr.f32.mxu0 0.0
    %129 = vmatmul.mubr.f32.gmra.mrb[0].mxu0 %v62
    %v130 = vpop.f32.mrb[0].mxu0
    %v131 = vadd.f32 %v58, %v130
    %v132 = vpop.f32.mrb[0].mxu0
    %133 = vdwg.mxu0
    %v134 = vtanh.pop %v131
    %v135 = vld [vmem:[%s3] sm:$0x1]
    %s136 = sld [smem:[#allocation2]]
    %v137 = vstv %s136
    %v139 = vsel %vm60, %v135, 0
    %v142 = vsel %vm60, %v134, 0
    %144 = vmatprep.subr.mxu0 0.0
    %145 = vmatpush1.xpose.msra.mxu0 %v142
    %146 = vmatprep.subr.mxu0 0.0
    %147 = vmatpush1.xpose.msra.mxu0 0.0
    %148 = vmatprep.subr.mxu0 0.0
    %149 = vmatpush1.xpose.msra.mxu0 0.0
    %150 = vmatprep.subr.mxu0 0.0
    %151 = vmatpush1.xpose.msra.mxu0 0.0
    %152 = vmatprep.subr.mxu0 0.0
    %153 = vmatpush1.xpose.msra.mxu0 0.0
    %154 = vmatprep.subr.mxu0 0.0
    %155 = vmatpush1.xpose.msra.mxu0 0.0
    %156 = vmatprep.subr.mxu0 0.0
    %157 = vmatpush1.xpose.msra.mxu0 0.0
    %158 = vmatprep.subr.mxu0 0.0
    %159 = vmatpush1.xpose.msra.mxu0 0.0
    %160 = vmatprep.subr.mxu0 0.0
    %161 = vmatpush1.xpose.msra.mxu0 0.0
    %162 = vmatprep.subr.mxu0 0.0
    %163 = vmatpush1.xpose.msra.mxu0 0.0
    %164 = vmatprep.subr.mxu0 0.0
    %165 = vmatpush1.xpose.msra.mxu0 0.0
    %166 = vmatprep.subr.mxu0 0.0
    %167 = vmatpush1.xpose.msra.mxu0 0.0
    %168 = vmatprep.subr.mxu0 0.0
    %169 = vmatpush1.xpose.msra.mxu0 0.0
    %170 = vmatprep.subr.mxu0 0.0
    %171 = vmatpush1.xpose.msra.mxu0 0.0
    %172 = vmatprep.subr.mxu0 0.0
    %173 = vmatpush1.xpose.msra.mxu0 0.0
    %174 = vmatprep.subr.mxu0 0.0
    %175 = vmatpush1.xpose.msra.mxu0 0.0
    %176 = vmatprep.subr.mxu0 0.0
    %177 = vmatpush1.xpose.msra.mxu0 0.0
    %178 = vmatprep.subr.mxu0 0.0
    %179 = vmatpush1.xpose.msra.mxu0 0.0
    %180 = vmatprep.subr.mxu0 0.0
    %181 = vmatpush1.xpose.msra.mxu0 0.0
    %182 = vmatprep.subr.mxu0 0.0
    %183 = vmatpush1.xpose.msra.mxu0 0.0
    %184 = vmatprep.subr.mxu0 0.0
    %185 = vmatpush1.xpose.msra.mxu0 0.0
    %186 = vmatprep.subr.mxu0 0.0
    %187 = vmatpush1.xpose.msra.mxu0 0.0
    %188 = vmatprep.subr.mxu0 0.0
    %189 = vmatpush1.xpose.msra.mxu0 0.0
    %190 = vmatprep.subr.mxu0 0.0
    %191 = vmatpush1.xpose.msra.mxu0 0.0
    %192 = vmatprep.subr.mxu0 0.0
    %193 = vmatpush1.xpose.msra.mxu0 0.0
    %194 = vmatprep.subr.mxu0 0.0
    %195 = vmatpush1.xpose.msra.mxu0 0.0
    %196 = vmatprep.subr.mxu0 0.0
    %197 = vmatpush1.xpose.msra.mxu0 0.0
    %198 = vmatprep.subr.mxu0 0.0
    %199 = vmatpush1.xpose.msra.mxu0 0.0
    %200 = vmatprep.subr.mxu0 0.0
    %201 = vmatpush1.xpose.msra.mxu0 0.0
    %202 = vmatprep.subr.mxu0 0.0
    %203 = vmatpush1.xpose.msra.mxu0 0.0
    %204 = vmatprep.subr.mxu0 0.0
    %205 = vmatpush1.xpose.msra.mxu0 0.0
    %206 = vmatprep.subr.mxu0 0.0
    %207 = vmatpush1.xpose.msra.mxu0 0.0
    %208 = vmatprep.mubr.f32.mxu0 0.0
    %209 = vmatmul.mubr.f32.gmra.mrb[0].mxu0 %v139
    %v210 = vpop.f32.mrb[0].mxu0
    %v211 = vadd.f32 %v137, %v210
    %v212 = vpop.f32.mrb[0].mxu0
    %213 = vdwg.mxu0
    %vm214 = vcmask 57344
    %215 = vst.msk [vmem:[#allocation8] sm:$0x1] %vm214, %v211
    // Predicated region
    $region30: #{tpu_custom_call.1} parent=1 // pred_check
      _
    $region31: #{tpu_custom_call.1} parent=1 // pred_check_branch
      %217 = sbr.rel (0) target = $region33
    $region32: #{tpu_custom_call.1} parent=1 // pred_region
      %s219 = ssub.s32 16, 16
      %220 = vsyncadd [#allocation5], %s219
      %s222 = sshll.u32 [#allocation8], 4
      %s223 = int_to_ptr.vmem [resolvable:$true] %s222
      %225 = dma.vmem_to_hbm [thread:$0]  %s223, 16, %s5, [#allocation5]
    $region33: #{tpu_custom_call.1} parent=1 // pred_fallthru
      _
    // Predicated region
    $region34: #{tpu_custom_call.1} parent=1 // pred_check
      _
    $region35: #{tpu_custom_call.1} parent=1 // pred_check_branch
      %227 = sbr.rel (0) target = $region37
    $region36: #{tpu_custom_call.1} parent=1 // pred_region
      %228 = dma.done [#allocation5], 16
    $region37: #{tpu_custom_call.1} parent=1 // pred_fallthru
      _
    %229 = vsyncpa [#allocation4], 1
    %230 = vsyncpa [#allocation7], 1
    %231 = vsyncpa [#allocation5], 1

</llo_original>
